<compile_context>
chip_gen: v5e
topology: v5e:2x2
jax: 0.10.0
libtpu: 0.0.40
codegen_flags: <defaults>
</compile_context>

<pallas_src>
import math
import functools

import jax
import jax.numpy as jnp
from jax import lax
from jax.experimental import pallas as pl
from jax.experimental.pallas import tpu as pltpu


LN_EPS = 1e-12
_INV_SQRT2 = 0.7071067811865476


def _layernorm(v, w, b):
    # TF-style layernorm (eps inside the sqrt), matching the PyTorch LayerNorm.
    u = jnp.mean(v, axis=-1, keepdims=True)
    c = v - u
    s = jnp.mean(c * c, axis=-1, keepdims=True)
    return c * lax.rsqrt(s + LN_EPS) * w + b


def fmlp_kernel(x_ref, dft_ref, w_ri_ref, lnw_ref, lnb_ref,
                w1_ref, b1_ref, w2_ref, b2_ref, o_ref,
                *, n_freq_pad, batch_tile, lane_dense, mxu_dtype):
    fp = n_freq_pad
    tb = batch_tile
    _, seq_len, dim = x_ref.shape

    dft = dft_ref[...]                       # (2*Fp, S), MXU dtype
    w_ri = w_ri_ref[...]                     # (2*Fp, D), f32, alpha-folded filter
    wra, wia = w_ri[:fp], w_ri[fp:]

    x = x_ref[...].astype(jnp.float32)       # (TB, S, D)

    # --- spectral filter: rfft -> complex multiply -> irfft (all ortho) ---
    seq_rows = []
    for b in range(tb):
        xb = x[b]                                                    # (S, D)
        x2 = jnp.dot(dft, xb.astype(mxu_dtype),
                     preferred_element_type=jnp.float32)             # (2Fp, D)
        xr, xi = x2[:fp], x2[fp:]
        yr = xr * wra - xi * wia                                     # alpha*Re(X*W)
        yi = xr * wia + xi * wra                                     # alpha*Im(X*W)
        y2 = jnp.concatenate([yr, yi], axis=0)                       # (2Fp, D)
        # irfft == dft^T @ (alpha ⊙ Y): contract the frequency axis (dim 0).
        seq_b = lax.dot_general(dft, y2.astype(mxu_dtype),
                                (((0,), (0,)), ((), ())),
                                preferred_element_type=jnp.float32)  # (S, D)
        seq_rows.append(seq_b)
    seq2d = jnp.concatenate(seq_rows, axis=0)                        # (TB*S, D)

    lnw = lnw_ref[...]                       # (1, D)
    lnb = lnb_ref[...]                       # (1, D)
    x2d = x.reshape(tb * seq_len, dim)       # leading-dim merge (cheap)

    # --- residual + LayerNorm ---
    h = _layernorm(seq2d + x2d, lnw, lnb)

    # --- feed-forward: Linear -> GELU(erf) -> Linear ---
    h1 = jnp.dot(h.astype(mxu_dtype), w1_ref[...],
                 preferred_element_type=jnp.float32) + b1_ref[...]
    h1 = h1 * 0.5 * (1.0 + lax.erf(h1 * _INV_SQRT2))
    h2 = jnp.dot(h1.astype(mxu_dtype), w2_ref[...],
                 preferred_element_type=jnp.float32) + b2_ref[...]

    # --- residual with the ORIGINAL input + LayerNorm ---
    out2d = _layernorm(h2 + x2d, lnw, lnb)   # (TB*S, D)

    if lane_dense:
        o_ref[...] = out2d.reshape(tb, seq_len * dim).astype(o_ref.dtype)
    else:
        o_ref[...] = out2d.reshape(tb, seq_len, dim).astype(o_ref.dtype)


def _round_up(x, m):
    return (x + m - 1) // m * m


def _pick_batch_tile(batch, seq_len):
    """Largest divisor of `batch` keeping the FFN M-dim (tb*seq) moderate."""
    best = 1
    for tb in range(1, batch + 1):
        if batch % tb == 0 and tb * seq_len <= 512 and tb <= 16:
            best = tb
    return best


def _spectral_constants(seq_len, wr, wi, mxu_dtype):
    """Stacked real-DFT matrix + alpha/ortho-folded filter (rfft/irfft, ortho)."""
    f = seq_len // 2 + 1
    fp = _round_up(f, 8)
    n = jnp.arange(seq_len, dtype=jnp.float32)
    k = jnp.arange(f, dtype=jnp.float32)
    ang = 2.0 * math.pi * jnp.outer(k, n) / seq_len          # (F, S)
    scale = 1.0 / math.sqrt(seq_len)
    cf = jnp.cos(ang) * scale                                # Xr = cf @ x
    sf = -jnp.sin(ang) * scale                               # Xi = sf @ x
    pad = ((0, fp - f), (0, 0))
    dft = jnp.concatenate([jnp.pad(cf, pad), jnp.pad(sf, pad)], axis=0)  # (2Fp, S)

    alpha = jnp.full((f, 1), 2.0, dtype=jnp.float32)         # Hermitian weights
    alpha = alpha.at[0, 0].set(1.0)
    if seq_len % 2 == 0:
        alpha = alpha.at[f - 1, 0].set(1.0)
    w_ri = jnp.concatenate([jnp.pad(alpha * wr, pad),
                            jnp.pad(alpha * wi, pad)], axis=0)           # (2Fp, D)
    return dft.astype(mxu_dtype), w_ri.astype(jnp.float32), fp


@functools.partial(jax.jit, static_argnames=("use_bf16_matmul", "lane_dense"))
def fmlp_forward(x, wr, wi, lnw, lnb, w1, b1, w2, b2,
                 *, use_bf16_matmul=False, lane_dense=None):
    batch, seq_len, dim = x.shape
    h4 = w1.shape[1]
    assert w1.shape == (dim, h4) and w2.shape == (h4, dim)

    mxu_dtype = jnp.bfloat16 if use_bf16_matmul else jnp.float32
    dft, w_ri, fp = _spectral_constants(seq_len, wr, wi, mxu_dtype)

    tb = _pick_batch_tile(batch, seq_len)
    if lane_dense is None:
        lane_dense = ((seq_len * dim) % 128 == 0) and (tb == batch or tb % 8 == 0)

    kernel = functools.partial(
        fmlp_kernel, n_freq_pad=fp, batch_tile=tb,
        lane_dense=lane_dense, mxu_dtype=mxu_dtype)

    # Rough VMEM budget: (double-buffered) blocks + constants + activation slab.
    msz = 2 if use_bf16_matmul else 4
    const_bytes = (2 * fp * seq_len + 2 * dim * h4) * msz \
                  + (2 * fp * dim + 3 * dim + h4) * 4
    block_bytes = 2 * tb * seq_len * dim * 4
    act_bytes = tb * seq_len * (4 * dim + h4) * 4
    vmem_limit = int(min(max(2 * (const_bytes + block_bytes) + 2 * act_bytes
                             + (2 << 20), 8 << 20), 32 << 20))

    const2d = lambda shp: pl.BlockSpec(shp, lambda i: (0, 0))
    if lane_dense:
        out_shape = jax.ShapeDtypeStruct((batch, seq_len * dim), jnp.float32)
        out_spec = pl.BlockSpec((tb, seq_len * dim), lambda i: (i, 0))
    else:
        out_shape = jax.ShapeDtypeStruct((batch, seq_len, dim), jnp.float32)
        out_spec = pl.BlockSpec((tb, seq_len, dim), lambda i: (i, 0, 0))

    out = pl.pallas_call(
        kernel,
        out_shape=out_shape,
        grid_spec=pltpu.PrefetchScalarGridSpec(
            num_scalar_prefetch=0,
            grid=(batch // tb,),
            in_specs=[
                pl.BlockSpec((tb, seq_len, dim), lambda i: (i, 0, 0)),  # x
                const2d((2 * fp, seq_len)),                             # stacked DFT
                const2d((2 * fp, dim)),                                 # stacked filter
                const2d((1, dim)),                                      # ln weight
                const2d((1, dim)),                                      # ln bias
                const2d((dim, h4)),                                     # dense_1 W^T
                const2d((1, h4)),                                       # dense_1 b
                const2d((h4, dim)),                                     # dense_2 W^T
                const2d((1, dim)),                                      # dense_2 b
            ],
            out_specs=out_spec,
        ),
        compiler_params=pltpu.CompilerParams(
            dimension_semantics=("parallel",),
            vmem_limit_bytes=vmem_limit),
    )(x, dft, w_ri, lnw, lnb,
      w1.astype(mxu_dtype), b1, w2.astype(mxu_dtype), b2)

    if lane_dense:
        out = out.reshape(batch, seq_len, dim)
    return out


def reference_forward(x, wr, wi, lnw, lnb, w1, b1, w2, b2):
    """Pure-JAX reference mirroring the PyTorch forward."""
    batch, seq_len, dim = x.shape
    xc = jnp.fft.rfft(x, axis=1, norm="ortho")
    xc = xc * (wr + 1j * wi)[None]
    seq = jnp.fft.irfft(xc, n=seq_len, axis=1, norm="ortho").astype(jnp.float32)

    def ln(v):
        u = jnp.mean(v, axis=-1, keepdims=True)
        s = jnp.mean((v - u) ** 2, axis=-1, keepdims=True)
        return lnw[0] * ((v - u) / jnp.sqrt(s + LN_EPS)) + lnb[0]

    h = ln(seq + x)
    h1 = h @ w1 + b1[0]
    h1 = h1 * 0.5 * (1.0 + lax.erf(h1 / math.sqrt(2.0)))
    h2 = h1 @ w2 + b2[0]
    return ln(h2 + x)


if __name__ == "__main__":
    B, S, D = 2, 8, 32          # batch, max_seq_length, embedding_dim
    F = S // 2 + 1

    key = jax.random.PRNGKey(0)
    kx, kw, k1, kb1, k2, kb2 = jax.random.split(key, 6)

    x = jax.random.normal(kx, (B, S, D), dtype=jnp.float32)

    # complex_weight: (1, S//2+1, D, 2) * 0.02  -> split into real/imag (F, D)
    cw = jax.random.normal(kw, (1, F, D, 2), dtype=jnp.float32) * 0.02
    wr, wi = cw[0, :, :, 0], cw[0, :, :, 1]

    # LayerNorm params (single shared module in the PyTorch code)
    lnw = jnp.ones((1, D), dtype=jnp.float32)
    lnb = jnp.zeros((1, D), dtype=jnp.float32)

    # Linear layers stored pre-transposed: y = x @ W + b
    bound1 = 1.0 / math.sqrt(D)
    w1 = jax.random.uniform(k1, (D, 4 * D), jnp.float32, -bound1, bound1)
    b1 = jax.random.uniform(kb1, (1, 4 * D), jnp.float32, -bound1, bound1)
    bound2 = 1.0 / math.sqrt(4 * D)
    w2 = jax.random.uniform(k2, (4 * D, D), jnp.float32, -bound2, bound2)
    b2 = jax.random.uniform(kb2, (1, D), jnp.float32, -bound2, bound2)

    args = (x, wr, wi, lnw, lnb, w1, b1, w2, b2)

    # Primary path: f32 MXU operands, lane-dense (B, S*D) output.  If this
    # Mosaic build cannot lower the in-kernel (rows, D) -> (TB, S*D) reshape,
    # fall back to the 3-D output layout (same math, masked final stores).
    try:
        out = jax.block_until_ready(fmlp_forward(*args))
        ld = None
    except Exception:
        ld = False
        out = jax.block_until_ready(fmlp_forward(*args, lane_dense=False))

    ref = reference_forward(*args)
    assert out.shape == (B, S, D)
    err = float(jnp.max(jnp.abs(out - ref)))
    assert jnp.allclose(out, ref, rtol=1e-3, atol=2e-4), err

    # bf16 MXU-operand variant (v6e/v7x optimization); elementwise math stays
    # f32, so only the matmuls lose precision -> loose tolerance check.
    out_bf16 = jax.block_until_ready(
        fmlp_forward(*args, use_bf16_matmul=True, lane_dense=ld))
    assert out_bf16.shape == (B, S, D)
    assert float(jnp.max(jnp.abs(out_bf16 - ref))) < 0.25

    print("KERNEL_OK")
</pallas_src>

<mosaic_0001>
module attributes {stable_mosaic.version = 11 : i64} {
  func.func @fmlp_kernel(%arg0: i32, %arg1: memref<2x8x32xf32, #tpu.memory_space<vmem>>, %arg2: memref<16x8xf32, #tpu.memory_space<vmem>>, %arg3: memref<16x32xf32, #tpu.memory_space<vmem>>, %arg4: memref<1x32xf32, #tpu.memory_space<vmem>>, %arg5: memref<1x32xf32, #tpu.memory_space<vmem>>, %arg6: memref<32x128xf32, #tpu.memory_space<vmem>>, %arg7: memref<1x128xf32, #tpu.memory_space<vmem>>, %arg8: memref<128x32xf32, #tpu.memory_space<vmem>>, %arg9: memref<1x32xf32, #tpu.memory_space<vmem>>, %arg10: memref<2x256xf32, #tpu.memory_space<vmem>>) attributes {dimension_semantics = [#tpu.dimension_semantics<parallel>], iteration_bounds = array<i64: 1>, scalar_prefetch = 0 : i64, scratch_operands = 0 : i64, tpu.core_type = #tpu.core_type<tc>, window_params = [{transform_indices = @transform_0, window_bounds = array<i64: 2, 8, 32>}, {pipeline_mode = #tpu.pipeline_mode<synchronous>, transform_indices = @transform_1, window_bounds = array<i64: 16, 8>}, {pipeline_mode = #tpu.pipeline_mode<synchronous>, transform_indices = @transform_2, window_bounds = array<i64: 16, 32>}, {pipeline_mode = #tpu.pipeline_mode<synchronous>, transform_indices = @transform_3, window_bounds = array<i64: 1, 32>}, {pipeline_mode = #tpu.pipeline_mode<synchronous>, transform_indices = @transform_4, window_bounds = array<i64: 1, 32>}, {pipeline_mode = #tpu.pipeline_mode<synchronous>, transform_indices = @transform_5, window_bounds = array<i64: 32, 128>}, {pipeline_mode = #tpu.pipeline_mode<synchronous>, transform_indices = @transform_6, window_bounds = array<i64: 1, 128>}, {pipeline_mode = #tpu.pipeline_mode<synchronous>, transform_indices = @transform_7, window_bounds = array<i64: 128, 32>}, {pipeline_mode = #tpu.pipeline_mode<synchronous>, transform_indices = @transform_8, window_bounds = array<i64: 1, 32>}, {transform_indices = @transform_9, window_bounds = array<i64: 2, 256>}]} {
    %c0 = arith.constant 0 : index
    %c0_0 = arith.constant 0 : index
    %0 = vector.load %arg2[%c0, %c0_0] : memref<16x8xf32, #tpu.memory_space<vmem>>, vector<16x8xf32>
    %c0_1 = arith.constant 0 : index
    %c0_2 = arith.constant 0 : index
    %1 = vector.load %arg3[%c0_1, %c0_2] : memref<16x32xf32, #tpu.memory_space<vmem>>, vector<16x32xf32>
    %2 = vector.extract_strided_slice %1 {offsets = [0, 0], sizes = [8, 32], strides = [1, 1]} : vector<16x32xf32> to vector<8x32xf32>
    %3 = vector.extract_strided_slice %1 {offsets = [8, 0], sizes = [8, 32], strides = [1, 1]} : vector<16x32xf32> to vector<8x32xf32>
    %c0_3 = arith.constant 0 : index
    %c0_4 = arith.constant 0 : index
    %c0_5 = arith.constant 0 : index
    %4 = vector.load %arg1[%c0_3, %c0_4, %c0_5] : memref<2x8x32xf32, #tpu.memory_space<vmem>>, vector<2x8x32xf32>
    %5 = vector.extract_strided_slice %4 {offsets = [0, 0, 0], sizes = [1, 8, 32], strides = [1, 1, 1]} : vector<2x8x32xf32> to vector<1x8x32xf32>
    %6 = vector.shape_cast %5 : vector<1x8x32xf32> to vector<8x32xf32>
    %cst = arith.constant dense<0.000000e+00> : vector<16x32xf32>
    %7 = tpu.matmul %0, %6, %cst {dimension_numbers = #tpu.dot_dimension_numbers<[1], [0], [0], [1], [0, 0, 1, 1], [], []>} : vector<16x8xf32>, vector<8x32xf32>, vector<16x32xf32> -> vector<16x32xf32>
    %8 = vector.extract_strided_slice %7 {offsets = [0, 0], sizes = [8, 32], strides = [1, 1]} : vector<16x32xf32> to vector<8x32xf32>
    %9 = vector.extract_strided_slice %7 {offsets = [8, 0], sizes = [8, 32], strides = [1, 1]} : vector<16x32xf32> to vector<8x32xf32>
    %10 = arith.mulf %8, %2 : vector<8x32xf32>
    %11 = arith.mulf %9, %3 : vector<8x32xf32>
    %12 = arith.subf %10, %11 : vector<8x32xf32>
    %13 = arith.mulf %8, %3 : vector<8x32xf32>
    %14 = arith.mulf %9, %2 : vector<8x32xf32>
    %15 = arith.addf %13, %14 : vector<8x32xf32>
    %16 = tpu.concatenate %12, %15 in 0 : vector<8x32xf32>, vector<8x32xf32> -> vector<16x32xf32>
    %cst_6 = arith.constant dense<0.000000e+00> : vector<8x32xf32>
    %17 = tpu.matmul %0, %16, %cst_6 {dimension_numbers = #tpu.dot_dimension_numbers<[0], [0], [1], [1], [0, 1, 1, 1], [], []>} : vector<16x8xf32>, vector<16x32xf32>, vector<8x32xf32> -> vector<8x32xf32>
    %18 = vector.extract_strided_slice %4 {offsets = [1, 0, 0], sizes = [1, 8, 32], strides = [1, 1, 1]} : vector<2x8x32xf32> to vector<1x8x32xf32>
    %19 = vector.shape_cast %18 : vector<1x8x32xf32> to vector<8x32xf32>
    %cst_7 = arith.constant dense<0.000000e+00> : vector<16x32xf32>
    %20 = tpu.matmul %0, %19, %cst_7 {dimension_numbers = #tpu.dot_dimension_numbers<[1], [0], [0], [1], [0, 0, 1, 1], [], []>} : vector<16x8xf32>, vector<8x32xf32>, vector<16x32xf32> -> vector<16x32xf32>
    %21 = vector.extract_strided_slice %20 {offsets = [0, 0], sizes = [8, 32], strides = [1, 1]} : vector<16x32xf32> to vector<8x32xf32>
    %22 = vector.extract_strided_slice %20 {offsets = [8, 0], sizes = [8, 32], strides = [1, 1]} : vector<16x32xf32> to vector<8x32xf32>
    %23 = arith.mulf %21, %2 : vector<8x32xf32>
    %24 = arith.mulf %22, %3 : vector<8x32xf32>
    %25 = arith.subf %23, %24 : vector<8x32xf32>
    %26 = arith.mulf %21, %3 : vector<8x32xf32>
    %27 = arith.mulf %22, %2 : vector<8x32xf32>
    %28 = arith.addf %26, %27 : vector<8x32xf32>
    %29 = tpu.concatenate %25, %28 in 0 : vector<8x32xf32>, vector<8x32xf32> -> vector<16x32xf32>
    %cst_8 = arith.constant dense<0.000000e+00> : vector<8x32xf32>
    %30 = tpu.matmul %0, %29, %cst_8 {dimension_numbers = #tpu.dot_dimension_numbers<[0], [0], [1], [1], [0, 1, 1, 1], [], []>} : vector<16x8xf32>, vector<16x32xf32>, vector<8x32xf32> -> vector<8x32xf32>
    %31 = tpu.concatenate %17, %30 in 0 : vector<8x32xf32>, vector<8x32xf32> -> vector<16x32xf32>
    %c0_9 = arith.constant 0 : index
    %c0_10 = arith.constant 0 : index
    %32 = vector.load %arg4[%c0_9, %c0_10] : memref<1x32xf32, #tpu.memory_space<vmem>>, vector<1x32xf32>
    %c0_11 = arith.constant 0 : index
    %c0_12 = arith.constant 0 : index
    %33 = vector.load %arg5[%c0_11, %c0_12] : memref<1x32xf32, #tpu.memory_space<vmem>>, vector<1x32xf32>
    %34 = vector.shape_cast %4 : vector<2x8x32xf32> to vector<16x32xf32>
    %35 = arith.addf %31, %34 : vector<16x32xf32>
    %cst_13 = arith.constant dense<0.000000e+00> : vector<16xf32>
    %36 = vector.multi_reduction <add>, %35, %cst_13 [1] : vector<16x32xf32> to vector<16xf32>
    %37 = vector.shape_cast %36 : vector<16xf32> to vector<16x1xf32>
    %cst_14 = arith.constant 3.200000e+01 : f32
    %38 = vector.broadcast %cst_14 : f32 to vector<16x1xf32>
    %39 = arith.divf %37, %38 : vector<16x1xf32>
    %40 = vector.broadcast %39 : vector<16x1xf32> to vector<16x32xf32>
    %41 = arith.subf %35, %40 : vector<16x32xf32>
    %42 = arith.mulf %41, %41 : vector<16x32xf32>
    %cst_15 = arith.constant dense<0.000000e+00> : vector<16xf32>
    %43 = vector.multi_reduction <add>, %42, %cst_15 [1] : vector<16x32xf32> to vector<16xf32>
    %44 = vector.shape_cast %43 : vector<16xf32> to vector<16x1xf32>
    %cst_16 = arith.constant 3.200000e+01 : f32
    %45 = vector.broadcast %cst_16 : f32 to vector<16x1xf32>
    %46 = arith.divf %44, %45 : vector<16x1xf32>
    %cst_17 = arith.constant 9.99999996E-13 : f32
    %47 = vector.broadcast %cst_17 : f32 to vector<16x1xf32>
    %48 = arith.addf %46, %47 : vector<16x1xf32>
    %49 = math.rsqrt %48 : vector<16x1xf32>
    %50 = vector.broadcast %49 : vector<16x1xf32> to vector<16x32xf32>
    %51 = arith.mulf %41, %50 : vector<16x32xf32>
    %52 = vector.broadcast %32 : vector<1x32xf32> to vector<16x32xf32>
    %53 = arith.mulf %51, %52 : vector<16x32xf32>
    %54 = vector.broadcast %33 : vector<1x32xf32> to vector<16x32xf32>
    %55 = arith.addf %53, %54 : vector<16x32xf32>
    %c0_18 = arith.constant 0 : index
    %c0_19 = arith.constant 0 : index
    %56 = vector.load %arg6[%c0_18, %c0_19] : memref<32x128xf32, #tpu.memory_space<vmem>>, vector<32x128xf32>
    %cst_20 = arith.constant dense<0.000000e+00> : vector<16x128xf32>
    %57 = tpu.matmul %55, %56, %cst_20 {dimension_numbers = #tpu.dot_dimension_numbers<[1], [0], [0], [1], [0, 0, 1, 1], [], []>} : vector<16x32xf32>, vector<32x128xf32>, vector<16x128xf32> -> vector<16x128xf32>
    %c0_21 = arith.constant 0 : index
    %c0_22 = arith.constant 0 : index
    %58 = vector.load %arg7[%c0_21, %c0_22] : memref<1x128xf32, #tpu.memory_space<vmem>>, vector<1x128xf32>
    %59 = vector.broadcast %58 : vector<1x128xf32> to vector<16x128xf32>
    %60 = arith.addf %57, %59 : vector<16x128xf32>
    %cst_23 = arith.constant 5.000000e-01 : f32
    %61 = vector.broadcast %cst_23 : f32 to vector<16x128xf32>
    %62 = arith.mulf %60, %61 : vector<16x128xf32>
    %cst_24 = arith.constant 0.707106769 : f32
    %63 = vector.broadcast %cst_24 : f32 to vector<16x128xf32>
    %64 = arith.mulf %60, %63 : vector<16x128xf32>
    %65 = math.erf %64 : vector<16x128xf32>
    %cst_25 = arith.constant 1.000000e+00 : f32
    %66 = vector.broadcast %cst_25 : f32 to vector<16x128xf32>
    %67 = arith.addf %66, %65 : vector<16x128xf32>
    %68 = arith.mulf %62, %67 : vector<16x128xf32>
    %c0_26 = arith.constant 0 : index
    %c0_27 = arith.constant 0 : index
    %69 = vector.load %arg8[%c0_26, %c0_27] : memref<128x32xf32, #tpu.memory_space<vmem>>, vector<128x32xf32>
    %cst_28 = arith.constant dense<0.000000e+00> : vector<16x32xf32>
    %70 = tpu.matmul %68, %69, %cst_28 {dimension_numbers = #tpu.dot_dimension_numbers<[1], [0], [0], [1], [0, 0, 1, 1], [], []>} : vector<16x128xf32>, vector<128x32xf32>, vector<16x32xf32> -> vector<16x32xf32>
    %c0_29 = arith.constant 0 : index
    %c0_30 = arith.constant 0 : index
    %71 = vector.load %arg9[%c0_29, %c0_30] : memref<1x32xf32, #tpu.memory_space<vmem>>, vector<1x32xf32>
    %72 = vector.broadcast %71 : vector<1x32xf32> to vector<16x32xf32>
    %73 = arith.addf %70, %72 : vector<16x32xf32>
    %74 = arith.addf %73, %34 : vector<16x32xf32>
    %cst_31 = arith.constant dense<0.000000e+00> : vector<16xf32>
    %75 = vector.multi_reduction <add>, %74, %cst_31 [1] : vector<16x32xf32> to vector<16xf32>
    %76 = vector.shape_cast %75 : vector<16xf32> to vector<16x1xf32>
    %cst_32 = arith.constant 3.200000e+01 : f32
    %77 = vector.broadcast %cst_32 : f32 to vector<16x1xf32>
    %78 = arith.divf %76, %77 : vector<16x1xf32>
    %79 = vector.broadcast %78 : vector<16x1xf32> to vector<16x32xf32>
    %80 = arith.subf %74, %79 : vector<16x32xf32>
    %81 = arith.mulf %80, %80 : vector<16x32xf32>
    %cst_33 = arith.constant dense<0.000000e+00> : vector<16xf32>
    %82 = vector.multi_reduction <add>, %81, %cst_33 [1] : vector<16x32xf32> to vector<16xf32>
    %83 = vector.shape_cast %82 : vector<16xf32> to vector<16x1xf32>
    %cst_34 = arith.constant 3.200000e+01 : f32
    %84 = vector.broadcast %cst_34 : f32 to vector<16x1xf32>
    %85 = arith.divf %83, %84 : vector<16x1xf32>
    %cst_35 = arith.constant 9.99999996E-13 : f32
    %86 = vector.broadcast %cst_35 : f32 to vector<16x1xf32>
    %87 = arith.addf %85, %86 : vector<16x1xf32>
    %88 = math.rsqrt %87 : vector<16x1xf32>
    %89 = vector.broadcast %88 : vector<16x1xf32> to vector<16x32xf32>
    %90 = arith.mulf %80, %89 : vector<16x32xf32>
    %91 = vector.broadcast %32 : vector<1x32xf32> to vector<16x32xf32>
    %92 = arith.mulf %90, %91 : vector<16x32xf32>
    %93 = vector.broadcast %33 : vector<1x32xf32> to vector<16x32xf32>
    %94 = arith.addf %92, %93 : vector<16x32xf32>
    %95 = vector.shape_cast %94 : vector<16x32xf32> to vector<2x256xf32>
    %c0_36 = arith.constant 0 : index
    %c0_37 = arith.constant 0 : index
    %96 = vector.load %arg10[%c0_36, %c0_37] : memref<2x256xf32, #tpu.memory_space<vmem>>, vector<2x256xf32>
    tpu.vector_store %arg10[%c0_36, %c0_37], %95 {strides = array<i32>} : memref<2x256xf32, #tpu.memory_space<vmem>>, vector<2x256xf32>,
    return
  }
  func.func @transform_0(%arg0: i32) -> (i32, i32, i32) {
    %c0_i32 = arith.constant 0 : i32
    %c0_i32_0 = arith.constant 0 : i32
    %c0_i32_1 = arith.constant 0 : i32
    return %arg0, %c0_i32, %c0_i32_0 : i32, i32, i32
  }
  func.func @transform_1(%arg0: i32) -> (i32, i32) {
    %c0_i32 = arith.constant 0 : i32
    %c0_i32_0 = arith.constant 0 : i32
    %c0_i32_1 = arith.constant 0 : i32
    return %c0_i32, %c0_i32_0 : i32, i32
  }
  func.func @transform_2(%arg0: i32) -> (i32, i32) {
    %c0_i32 = arith.constant 0 : i32
    %c0_i32_0 = arith.constant 0 : i32
    %c0_i32_1 = arith.constant 0 : i32
    return %c0_i32, %c0_i32_0 : i32, i32
  }
  func.func @transform_3(%arg0: i32) -> (i32, i32) {
    %c0_i32 = arith.constant 0 : i32
    %c0_i32_0 = arith.constant 0 : i32
    %c0_i32_1 = arith.constant 0 : i32
    return %c0_i32, %c0_i32_0 : i32, i32
  }
  func.func @transform_4(%arg0: i32) -> (i32, i32) {
    %c0_i32 = arith.constant 0 : i32
    %c0_i32_0 = arith.constant 0 : i32
    %c0_i32_1 = arith.constant 0 : i32
    return %c0_i32, %c0_i32_0 : i32, i32
  }
  func.func @transform_5(%arg0: i32) -> (i32, i32) {
    %c0_i32 = arith.constant 0 : i32
    %c0_i32_0 = arith.constant 0 : i32
    %c0_i32_1 = arith.constant 0 : i32
    return %c0_i32, %c0_i32_0 : i32, i32
  }
  func.func @transform_6(%arg0: i32) -> (i32, i32) {
    %c0_i32 = arith.constant 0 : i32
    %c0_i32_0 = arith.constant 0 : i32
    %c0_i32_1 = arith.constant 0 : i32
    return %c0_i32, %c0_i32_0 : i32, i32
  }
  func.func @transform_7(%arg0: i32) -> (i32, i32) {
    %c0_i32 = arith.constant 0 : i32
    %c0_i32_0 = arith.constant 0 : i32
    %c0_i32_1 = arith.constant 0 : i32
    return %c0_i32, %c0_i32_0 : i32, i32
  }
  func.func @transform_8(%arg0: i32) -> (i32, i32) {
    %c0_i32 = arith.constant 0 : i32
    %c0_i32_0 = arith.constant 0 : i32
    %c0_i32_1 = arith.constant 0 : i32
    return %c0_i32, %c0_i32_0 : i32, i32
  }
  func.func @transform_9(%arg0: i32) -> (i32, i32) {
    %c0_i32 = arith.constant 0 : i32
    %c0_i32_0 = arith.constant 0 : i32
    return %arg0, %c0_i32 : i32, i32
  }
}

module attributes {stable_mosaic.version = 11 : i64} {
  func.func @fmlp_kernel(%arg0: i32, %arg1: memref<2x8x32xf32, #tpu.memory_space<vmem>>, %arg2: memref<16x8xf32, #tpu.memory_space<vmem>>, %arg3: memref<16x32xf32, #tpu.memory_space<vmem>>, %arg4: memref<1x32xf32, #tpu.memory_space<vmem>>, %arg5: memref<1x32xf32, #tpu.memory_space<vmem>>, %arg6: memref<32x128xf32, #tpu.memory_space<vmem>>, %arg7: memref<1x128xf32, #tpu.memory_space<vmem>>, %arg8: memref<128x32xf32, #tpu.memory_space<vmem>>, %arg9: memref<1x32xf32, #tpu.memory_space<vmem>>, %arg10: memref<2x8x32xf32, #tpu.memory_space<vmem>>) attributes {dimension_semantics = [#tpu.dimension_semantics<parallel>], iteration_bounds = array<i64: 1>, scalar_prefetch = 0 : i64, scratch_operands = 0 : i64, tpu.core_type = #tpu.core_type<tc>, window_params = [{transform_indices = @transform_0, window_bounds = array<i64: 2, 8, 32>}, {pipeline_mode = #tpu.pipeline_mode<synchronous>, transform_indices = @transform_1, window_bounds = array<i64: 16, 8>}, {pipeline_mode = #tpu.pipeline_mode<synchronous>, transform_indices = @transform_2, window_bounds = array<i64: 16, 32>}, {pipeline_mode = #tpu.pipeline_mode<synchronous>, transform_indices = @transform_3, window_bounds = array<i64: 1, 32>}, {pipeline_mode = #tpu.pipeline_mode<synchronous>, transform_indices = @transform_4, window_bounds = array<i64: 1, 32>}, {pipeline_mode = #tpu.pipeline_mode<synchronous>, transform_indices = @transform_5, window_bounds = array<i64: 32, 128>}, {pipeline_mode = #tpu.pipeline_mode<synchronous>, transform_indices = @transform_6, window_bounds = array<i64: 1, 128>}, {pipeline_mode = #tpu.pipeline_mode<synchronous>, transform_indices = @transform_7, window_bounds = array<i64: 128, 32>}, {pipeline_mode = #tpu.pipeline_mode<synchronous>, transform_indices = @transform_8, window_bounds = array<i64: 1, 32>}, {transform_indices = @transform_9, window_bounds = array<i64: 2, 8, 32>}]} {
    %c0 = arith.constant 0 : index
    %c0_0 = arith.constant 0 : index
    %0 = vector.load %arg2[%c0, %c0_0] : memref<16x8xf32, #tpu.memory_space<vmem>>, vector<16x8xf32>
    %c0_1 = arith.constant 0 : index
    %c0_2 = arith.constant 0 : index
    %1 = vector.load %arg3[%c0_1, %c0_2] : memref<16x32xf32, #tpu.memory_space<vmem>>, vector<16x32xf32>
    %2 = vector.extract_strided_slice %1 {offsets = [0, 0], sizes = [8, 32], strides = [1, 1]} : vector<16x32xf32> to vector<8x32xf32>
    %3 = vector.extract_strided_slice %1 {offsets = [8, 0], sizes = [8, 32], strides = [1, 1]} : vector<16x32xf32> to vector<8x32xf32>
    %c0_3 = arith.constant 0 : index
    %c0_4 = arith.constant 0 : index
    %c0_5 = arith.constant 0 : index
    %4 = vector.load %arg1[%c0_3, %c0_4, %c0_5] : memref<2x8x32xf32, #tpu.memory_space<vmem>>, vector<2x8x32xf32>
    %5 = vector.extract_strided_slice %4 {offsets = [0, 0, 0], sizes = [1, 8, 32], strides = [1, 1, 1]} : vector<2x8x32xf32> to vector<1x8x32xf32>
    %6 = vector.shape_cast %5 : vector<1x8x32xf32> to vector<8x32xf32>
    %cst = arith.constant dense<0.000000e+00> : vector<16x32xf32>
    %7 = tpu.matmul %0, %6, %cst {dimension_numbers = #tpu.dot_dimension_numbers<[1], [0], [0], [1], [0, 0, 1, 1], [], []>} : vector<16x8xf32>, vector<8x32xf32>, vector<16x32xf32> -> vector<16x32xf32>
    %8 = vector.extract_strided_slice %7 {offsets = [0, 0], sizes = [8, 32], strides = [1, 1]} : vector<16x32xf32> to vector<8x32xf32>
    %9 = vector.extract_strided_slice %7 {offsets = [8, 0], sizes = [8, 32], strides = [1, 1]} : vector<16x32xf32> to vector<8x32xf32>
    %10 = arith.mulf %8, %2 : vector<8x32xf32>
    %11 = arith.mulf %9, %3 : vector<8x32xf32>
    %12 = arith.subf %10, %11 : vector<8x32xf32>
    %13 = arith.mulf %8, %3 : vector<8x32xf32>
    %14 = arith.mulf %9, %2 : vector<8x32xf32>
    %15 = arith.addf %13, %14 : vector<8x32xf32>
    %16 = tpu.concatenate %12, %15 in 0 : vector<8x32xf32>, vector<8x32xf32> -> vector<16x32xf32>
    %cst_6 = arith.constant dense<0.000000e+00> : vector<8x32xf32>
    %17 = tpu.matmul %0, %16, %cst_6 {dimension_numbers = #tpu.dot_dimension_numbers<[0], [0], [1], [1], [0, 1, 1, 1], [], []>} : vector<16x8xf32>, vector<16x32xf32>, vector<8x32xf32> -> vector<8x32xf32>
    %18 = vector.extract_strided_slice %4 {offsets = [1, 0, 0], sizes = [1, 8, 32], strides = [1, 1, 1]} : vector<2x8x32xf32> to vector<1x8x32xf32>
    %19 = vector.shape_cast %18 : vector<1x8x32xf32> to vector<8x32xf32>
    %cst_7 = arith.constant dense<0.000000e+00> : vector<16x32xf32>
    %20 = tpu.matmul %0, %19, %cst_7 {dimension_numbers = #tpu.dot_dimension_numbers<[1], [0], [0], [1], [0, 0, 1, 1], [], []>} : vector<16x8xf32>, vector<8x32xf32>, vector<16x32xf32> -> vector<16x32xf32>
    %21 = vector.extract_strided_slice %20 {offsets = [0, 0], sizes = [8, 32], strides = [1, 1]} : vector<16x32xf32> to vector<8x32xf32>
    %22 = vector.extract_strided_slice %20 {offsets = [8, 0], sizes = [8, 32], strides = [1, 1]} : vector<16x32xf32> to vector<8x32xf32>
    %23 = arith.mulf %21, %2 : vector<8x32xf32>
    %24 = arith.mulf %22, %3 : vector<8x32xf32>
    %25 = arith.subf %23, %24 : vector<8x32xf32>
    %26 = arith.mulf %21, %3 : vector<8x32xf32>
    %27 = arith.mulf %22, %2 : vector<8x32xf32>
    %28 = arith.addf %26, %27 : vector<8x32xf32>
    %29 = tpu.concatenate %25, %28 in 0 : vector<8x32xf32>, vector<8x32xf32> -> vector<16x32xf32>
    %cst_8 = arith.constant dense<0.000000e+00> : vector<8x32xf32>
    %30 = tpu.matmul %0, %29, %cst_8 {dimension_numbers = #tpu.dot_dimension_numbers<[0], [0], [1], [1], [0, 1, 1, 1], [], []>} : vector<16x8xf32>, vector<16x32xf32>, vector<8x32xf32> -> vector<8x32xf32>
    %31 = tpu.concatenate %17, %30 in 0 : vector<8x32xf32>, vector<8x32xf32> -> vector<16x32xf32>
    %c0_9 = arith.constant 0 : index
    %c0_10 = arith.constant 0 : index
    %32 = vector.load %arg4[%c0_9, %c0_10] : memref<1x32xf32, #tpu.memory_space<vmem>>, vector<1x32xf32>
    %c0_11 = arith.constant 0 : index
    %c0_12 = arith.constant 0 : index
    %33 = vector.load %arg5[%c0_11, %c0_12] : memref<1x32xf32, #tpu.memory_space<vmem>>, vector<1x32xf32>
    %34 = vector.shape_cast %4 : vector<2x8x32xf32> to vector<16x32xf32>
    %35 = arith.addf %31, %34 : vector<16x32xf32>
    %cst_13 = arith.constant dense<0.000000e+00> : vector<16xf32>
    %36 = vector.multi_reduction <add>, %35, %cst_13 [1] : vector<16x32xf32> to vector<16xf32>
    %37 = vector.shape_cast %36 : vector<16xf32> to vector<16x1xf32>
    %cst_14 = arith.constant 3.200000e+01 : f32
    %38 = vector.broadcast %cst_14 : f32 to vector<16x1xf32>
    %39 = arith.divf %37, %38 : vector<16x1xf32>
    %40 = vector.broadcast %39 : vector<16x1xf32> to vector<16x32xf32>
    %41 = arith.subf %35, %40 : vector<16x32xf32>
    %42 = arith.mulf %41, %41 : vector<16x32xf32>
    %cst_15 = arith.constant dense<0.000000e+00> : vector<16xf32>
    %43 = vector.multi_reduction <add>, %42, %cst_15 [1] : vector<16x32xf32> to vector<16xf32>
    %44 = vector.shape_cast %43 : vector<16xf32> to vector<16x1xf32>
    %cst_16 = arith.constant 3.200000e+01 : f32
    %45 = vector.broadcast %cst_16 : f32 to vector<16x1xf32>
    %46 = arith.divf %44, %45 : vector<16x1xf32>
    %cst_17 = arith.constant 9.99999996E-13 : f32
    %47 = vector.broadcast %cst_17 : f32 to vector<16x1xf32>
    %48 = arith.addf %46, %47 : vector<16x1xf32>
    %49 = math.rsqrt %48 : vector<16x1xf32>
    %50 = vector.broadcast %49 : vector<16x1xf32> to vector<16x32xf32>
    %51 = arith.mulf %41, %50 : vector<16x32xf32>
    %52 = vector.broadcast %32 : vector<1x32xf32> to vector<16x32xf32>
    %53 = arith.mulf %51, %52 : vector<16x32xf32>
    %54 = vector.broadcast %33 : vector<1x32xf32> to vector<16x32xf32>
    %55 = arith.addf %53, %54 : vector<16x32xf32>
    %c0_18 = arith.constant 0 : index
    %c0_19 = arith.constant 0 : index
    %56 = vector.load %arg6[%c0_18, %c0_19] : memref<32x128xf32, #tpu.memory_space<vmem>>, vector<32x128xf32>
    %cst_20 = arith.constant dense<0.000000e+00> : vector<16x128xf32>
    %57 = tpu.matmul %55, %56, %cst_20 {dimension_numbers = #tpu.dot_dimension_numbers<[1], [0], [0], [1], [0, 0, 1, 1], [], []>} : vector<16x32xf32>, vector<32x128xf32>, vector<16x128xf32> -> vector<16x128xf32>
    %c0_21 = arith.constant 0 : index
    %c0_22 = arith.constant 0 : index
    %58 = vector.load %arg7[%c0_21, %c0_22] : memref<1x128xf32, #tpu.memory_space<vmem>>, vector<1x128xf32>
    %59 = vector.broadcast %58 : vector<1x128xf32> to vector<16x128xf32>
    %60 = arith.addf %57, %59 : vector<16x128xf32>
    %cst_23 = arith.constant 5.000000e-01 : f32
    %61 = vector.broadcast %cst_23 : f32 to vector<16x128xf32>
    %62 = arith.mulf %60, %61 : vector<16x128xf32>
    %cst_24 = arith.constant 0.707106769 : f32
    %63 = vector.broadcast %cst_24 : f32 to vector<16x128xf32>
    %64 = arith.mulf %60, %63 : vector<16x128xf32>
    %65 = math.erf %64 : vector<16x128xf32>
    %cst_25 = arith.constant 1.000000e+00 : f32
    %66 = vector.broadcast %cst_25 : f32 to vector<16x128xf32>
    %67 = arith.addf %66, %65 : vector<16x128xf32>
    %68 = arith.mulf %62, %67 : vector<16x128xf32>
    %c0_26 = arith.constant 0 : index
    %c0_27 = arith.constant 0 : index
    %69 = vector.load %arg8[%c0_26, %c0_27] : memref<128x32xf32, #tpu.memory_space<vmem>>, vector<128x32xf32>
    %cst_28 = arith.constant dense<0.000000e+00> : vector<16x32xf32>
    %70 = tpu.matmul %68, %69, %cst_28 {dimension_numbers = #tpu.dot_dimension_numbers<[1], [0], [0], [1], [0, 0, 1, 1], [], []>} : vector<16x128xf32>, vector<128x32xf32>, vector<16x32xf32> -> vector<16x32xf32>
    %c0_29 = arith.constant 0 : index
    %c0_30 = arith.constant 0 : index
    %71 = vector.load %arg9[%c0_29, %c0_30] : memref<1x32xf32, #tpu.memory_space<vmem>>, vector<1x32xf32>
    %72 = vector.broadcast %71 : vector<1x32xf32> to vector<16x32xf32>
    %73 = arith.addf %70, %72 : vector<16x32xf32>
    %74 = arith.addf %73, %34 : vector<16x32xf32>
    %cst_31 = arith.constant dense<0.000000e+00> : vector<16xf32>
    %75 = vector.multi_reduction <add>, %74, %cst_31 [1] : vector<16x32xf32> to vector<16xf32>
    %76 = vector.shape_cast %75 : vector<16xf32> to vector<16x1xf32>
    %cst_32 = arith.constant 3.200000e+01 : f32
    %77 = vector.broadcast %cst_32 : f32 to vector<16x1xf32>
    %78 = arith.divf %76, %77 : vector<16x1xf32>
    %79 = vector.broadcast %78 : vector<16x1xf32> to vector<16x32xf32>
    %80 = arith.subf %74, %79 : vector<16x32xf32>
    %81 = arith.mulf %80, %80 : vector<16x32xf32>
    %cst_33 = arith.constant dense<0.000000e+00> : vector<16xf32>
    %82 = vector.multi_reduction <add>, %81, %cst_33 [1] : vector<16x32xf32> to vector<16xf32>
    %83 = vector.shape_cast %82 : vector<16xf32> to vector<16x1xf32>
    %cst_34 = arith.constant 3.200000e+01 : f32
    %84 = vector.broadcast %cst_34 : f32 to vector<16x1xf32>
    %85 = arith.divf %83, %84 : vector<16x1xf32>
    %cst_35 = arith.constant 9.99999996E-13 : f32
    %86 = vector.broadcast %cst_35 : f32 to vector<16x1xf32>
    %87 = arith.addf %85, %86 : vector<16x1xf32>
    %88 = math.rsqrt %87 : vector<16x1xf32>
    %89 = vector.broadcast %88 : vector<16x1xf32> to vector<16x32xf32>
    %90 = arith.mulf %80, %89 : vector<16x32xf32>
    %91 = vector.broadcast %32 : vector<1x32xf32> to vector<16x32xf32>
    %92 = arith.mulf %90, %91 : vector<16x32xf32>
    %93 = vector.broadcast %33 : vector<1x32xf32> to vector<16x32xf32>
    %94 = arith.addf %92, %93 : vector<16x32xf32>
    %95 = vector.shape_cast %94 : vector<16x32xf32> to vector<2x8x32xf32>
    %c0_36 = arith.constant 0 : index
    %c0_37 = arith.constant 0 : index
    %c0_38 = arith.constant 0 : index
    %96 = vector.load %arg10[%c0_36, %c0_37, %c0_38] : memref<2x8x32xf32, #tpu.memory_space<vmem>>, vector<2x8x32xf32>
    tpu.vector_store %arg10[%c0_36, %c0_37, %c0_38], %95 {strides = array<i32>} : memref<2x8x32xf32, #tpu.memory_space<vmem>>, vector<2x8x32xf32>,
    return
  }
  func.func @transform_0(%arg0: i32) -> (i32, i32, i32) {
    %c0_i32 = arith.constant 0 : i32
    %c0_i32_0 = arith.constant 0 : i32
    %c0_i32_1 = arith.constant 0 : i32
    return %arg0, %c0_i32, %c0_i32_0 : i32, i32, i32
  }
  func.func @transform_1(%arg0: i32) -> (i32, i32) {
    %c0_i32 = arith.constant 0 : i32
    %c0_i32_0 = arith.constant 0 : i32
    %c0_i32_1 = arith.constant 0 : i32
    return %c0_i32, %c0_i32_0 : i32, i32
  }
  func.func @transform_2(%arg0: i32) -> (i32, i32) {
    %c0_i32 = arith.constant 0 : i32
    %c0_i32_0 = arith.constant 0 : i32
    %c0_i32_1 = arith.constant 0 : i32
    return %c0_i32, %c0_i32_0 : i32, i32
  }
  func.func @transform_3(%arg0: i32) -> (i32, i32) {
    %c0_i32 = arith.constant 0 : i32
    %c0_i32_0 = arith.constant 0 : i32
    %c0_i32_1 = arith.constant 0 : i32
    return %c0_i32, %c0_i32_0 : i32, i32
  }
  func.func @transform_4(%arg0: i32) -> (i32, i32) {
    %c0_i32 = arith.constant 0 : i32
    %c0_i32_0 = arith.constant 0 : i32
    %c0_i32_1 = arith.constant 0 : i32
    return %c0_i32, %c0_i32_0 : i32, i32
  }
  func.func @transform_5(%arg0: i32) -> (i32, i32) {
    %c0_i32 = arith.constant 0 : i32
    %c0_i32_0 = arith.constant 0 : i32
    %c0_i32_1 = arith.constant 0 : i32
    return %c0_i32, %c0_i32_0 : i32, i32
  }
  func.func @transform_6(%arg0: i32) -> (i32, i32) {
    %c0_i32 = arith.constant 0 : i32
    %c0_i32_0 = arith.constant 0 : i32
    %c0_i32_1 = arith.constant 0 : i32
    return %c0_i32, %c0_i32_0 : i32, i32
  }
  func.func @transform_7(%arg0: i32) -> (i32, i32) {
    %c0_i32 = arith.constant 0 : i32
    %c0_i32_0 = arith.constant 0 : i32
    %c0_i32_1 = arith.constant 0 : i32
    return %c0_i32, %c0_i32_0 : i32, i32
  }
  func.func @transform_8(%arg0: i32) -> (i32, i32) {
    %c0_i32 = arith.constant 0 : i32
    %c0_i32_0 = arith.constant 0 : i32
    %c0_i32_1 = arith.constant 0 : i32
    return %c0_i32, %c0_i32_0 : i32, i32
  }
  func.func @transform_9(%arg0: i32) -> (i32, i32, i32) {
    %c0_i32 = arith.constant 0 : i32
    %c0_i32_0 = arith.constant 0 : i32
    %c0_i32_1 = arith.constant 0 : i32
    return %arg0, %c0_i32, %c0_i32_0 : i32, i32, i32
  }
}

</mosaic_0001>

<llo_original>
// kernel: fmlp_forward.1
$region0: #{fmlp_forward.1}
  #allocation0 [shape = 'u32[]', space=smem, size = 0x4, offset = 0x4, fixed_abs, tag = 'smem constant byte address 0x4 - core index']
  #allocation1 [shape = 'u32[72,128]{1,0:T(1,128)}', space=vmem, size = 0x9000, scoped, tag = 'internal scratch']
  %s0 = inlined_call_operand.vmem [shape: f32[2,8,32], index: 0, kind: input, shape index: {}]
  %s1 = inlined_call_operand.vmem [shape: f32[16,8], index: 1, kind: input, shape index: {}]
  %s2 = inlined_call_operand.vmem [shape: f32[16,32], index: 2, kind: input, shape index: {}]
  %s3 = inlined_call_operand.vmem [shape: f32[1,32], index: 3, kind: input, shape index: {}]
  %s4 = inlined_call_operand.vmem [shape: f32[1,32], index: 4, kind: input, shape index: {}]
  %s5 = inlined_call_operand.vmem [shape: f32[32,128], index: 5, kind: input, shape index: {}]
  %s6 = inlined_call_operand.vmem [shape: f32[1,128], index: 6, kind: input, shape index: {}]
  %s7 = inlined_call_operand.vmem [shape: f32[128,32], index: 7, kind: input, shape index: {}]
  %s8 = inlined_call_operand.vmem [shape: f32[1,32], index: 8, kind: input, shape index: {}]
  %s9 = inlined_call_operand.hbm [shape: f32[2,8,32], index: 9, kind: output, shape index: {}]
  %s10 = sld [smem:[#allocation0]]
  $region46: #{fmlp_forward.1} parent=0
    _
  %s12 = ssub.s32 1, %s10
  %s13 = scalar_select 0, %s12, %s10
  $region1: #{fmlp_forward.1} parent=0
    #allocation2 [shape = 'u8[8192]{0}', space=vmem, size = 0x2000, scoped, tag = 'output window, operand 0, single buffered']
    #allocation3 [shape = 's32[1]{0}', space=sflag, size = 0x4, scoped, tag = 'scoped memory for fmlp_forward.1']
    %14 = vsyncpa [#allocation3], 0
    // Predicated region
    $region2: #{fmlp_forward.1} parent=1 // pred_check
      _
    $region3: #{fmlp_forward.1} parent=1 // pred_check_branch
      %16 = sbr.rel (0) target = $region5
    $region4: #{fmlp_forward.1} parent=1 // pred_region
      _
    $region5: #{fmlp_forward.1} parent=1 // pred_fallthru
      _
    // Predicated region
    $region6: #{fmlp_forward.1} parent=1 // pred_check
      _
    $region7: #{fmlp_forward.1} parent=1 // pred_check_branch
      %18 = sbr.rel (0) target = $region9
    $region8: #{fmlp_forward.1} parent=1 // pred_region
      _
    $region9: #{fmlp_forward.1} parent=1 // pred_fallthru
      _
    // Predicated region
    $region10: #{fmlp_forward.1} parent=1 // pred_check
      _
    $region11: #{fmlp_forward.1} parent=1 // pred_check_branch
      %20 = sbr.rel (0) target = $region13
    $region12: #{fmlp_forward.1} parent=1 // pred_region
      _
    $region13: #{fmlp_forward.1} parent=1 // pred_fallthru
      _
    // Predicated region
    $region14: #{fmlp_forward.1} parent=1 // pred_check
      _
    $region15: #{fmlp_forward.1} parent=1 // pred_check_branch
      %22 = sbr.rel (0) target = $region17
    $region16: #{fmlp_forward.1} parent=1 // pred_region
      _
    $region17: #{fmlp_forward.1} parent=1 // pred_fallthru
      _
    // Predicated region
    $region18: #{fmlp_forward.1} parent=1 // pred_check
      _
    $region19: #{fmlp_forward.1} parent=1 // pred_check_branch
      %24 = sbr.rel (0) target = $region21
    $region20: #{fmlp_forward.1} parent=1 // pred_region
      _
    $region21: #{fmlp_forward.1} parent=1 // pred_fallthru
      _
    // Predicated region
    $region22: #{fmlp_forward.1} parent=1 // pred_check
      _
    $region23: #{fmlp_forward.1} parent=1 // pred_check_branch
      %26 = sbr.rel (0) target = $region25
    $region24: #{fmlp_forward.1} parent=1 // pred_region
      _
    $region25: #{fmlp_forward.1} parent=1 // pred_fallthru
      _
    // Predicated region
    $region26: #{fmlp_forward.1} parent=1 // pred_check
      _
    $region27: #{fmlp_forward.1} parent=1 // pred_check_branch
      %28 = sbr.rel (0) target = $region29
    $region28: #{fmlp_forward.1} parent=1 // pred_region
      _
    $region29: #{fmlp_forward.1} parent=1 // pred_fallthru
      _
    // Predicated region
    $region30: #{fmlp_forward.1} parent=1 // pred_check
      _
    $region31: #{fmlp_forward.1} parent=1 // pred_check_branch
      %30 = sbr.rel (0) target = $region33
    $region32: #{fmlp_forward.1} parent=1 // pred_region
      _
    $region33: #{fmlp_forward.1} parent=1 // pred_fallthru
      _
    // Predicated region
    $region34: #{fmlp_forward.1} parent=1 // pred_check
      _
    $region35: #{fmlp_forward.1} parent=1 // pred_check_branch
      %32 = sbr.rel (0) target = $region37
    $region36: #{fmlp_forward.1} parent=1 // pred_region
      _
    $region37: #{fmlp_forward.1} parent=1 // pred_fallthru
      _
    %v33 = vld [vmem:[%s1] sm:$0xff]
    %v34 = vld [vmem:[%s1 + $0x8] sm:$0xff]
    %v35 = vld [vmem:[%s2] sm:$0xff]
    %v36 = vld [vmem:[%s2 + $0x8] sm:$0xff]
    %v37 = vld [vmem:[%s0] sm:$0xff]
    %v38 = vld [vmem:[%s0 + $0x8] sm:$0xff]
    %vm39 = vcmask 64512
    %v41 = vsel %vm39, %v33, 0
    %v44 = vsel %vm39, %v34, 0
    %46 = vmatpush.msra.mxu0 0.0
    %47 = vmatpush.msra.mxu0 0.0
    %48 = vmatpush.msra.mxu0 0.0
    %49 = vmatpush.msra.mxu0 0.0
    %50 = vmatpush.msra.mxu0 0.0
    %51 = vmatpush.msra.mxu0 0.0
    %52 = vmatpush.msra.mxu0 0.0
    %53 = vmatpush.msra.mxu0 0.0
    %54 = vmatpush.msra.mxu0 0.0
    %55 = vmatpush.msra.mxu0 0.0
    %56 = vmatpush.msra.mxu0 0.0
    %57 = vmatpush.msra.mxu0 0.0
    %58 = vmatpush.msra.mxu0 0.0
    %59 = vmatpush.msra.mxu0 0.0
    %60 = vmatpush.msra.mxu0 0.0
    %61 = vmatpush.msra.mxu0 %v37
    %62 = vmatmul.f32.gmra.mxu0 %v41
    %v63 = vpop.f32.mrf.mxu0
    %v64 = vadd.f32 0.0, %v63
    %65 = vmatmul.f32.gmra.mxu0 %v44
    %v66 = vpop.f32.mrf.mxu0
    %v67 = vadd.f32 0.0, %v66
    %68 = vdwg.mxu0
    %v69 = vmul.f32 %v64, %v35
    %v70 = vmul.f32 %v67, %v36
    %v71 = vsub.f32 %v69, %v70
    %v72 = vmul.f32 %v64, %v36
    %v73 = vmul.f32 %v67, %v35
    %v74 = vadd.f32 %v72, %v73
    %75 = vxpose.xlu0.b32.start [1/16] %v33, 128
    %76 = vxpose.xlu0.b32.cont [2/16] %v34, 128
    %77 = vxpose.xlu0.b32.cont [3/16] 0.0, 128
    %78 = vxpose.xlu0.b32.cont [4/16] 0.0, 128
    %79 = vxpose.xlu0.b32.cont [5/16] 0.0, 128
    %80 = vxpose.xlu0.b32.cont [6/16] 0.0, 128
    %81 = vxpose.xlu0.b32.cont [7/16] 0.0, 128
    %82 = vxpose.xlu0.b32.cont [8/16] 0.0, 128
    %83 = vxpose.xlu0.b32.cont [9/16] 0.0, 128
    %84 = vxpose.xlu0.b32.cont [10/16] 0.0, 128
    %85 = vxpose.xlu0.b32.cont [11/16] 0.0, 128
    %86 = vxpose.xlu0.b32.cont [12/16] 0.0, 128
    %87 = vxpose.xlu0.b32.cont [13/16] 0.0, 128
    %88 = vxpose.xlu0.b32.cont [14/16] 0.0, 128
    %89 = vxpose.xlu0.b32.cont [15/16] 0.0, 128
    %90 = vxpose.xlu0.b32.end [16/16] 0.0, 128
    %v91 = vpop.trf.xlu0
    %v92 = vpop.trf.xlu0
    %v93 = vpop.trf.xlu0
    %v94 = vpop.trf.xlu0
    %v95 = vpop.trf.xlu0
    %v96 = vpop.trf.xlu0
    %v97 = vpop.trf.xlu0
    %v98 = vpop.trf.xlu0
    %v99 = vpop.trf.xlu0
    %v100 = vpop.trf.xlu0
    %v101 = vpop.trf.xlu0
    %v102 = vpop.trf.xlu0
    %v103 = vpop.trf.xlu0
    %v104 = vpop.trf.xlu0
    %v105 = vpop.trf.xlu0
    %v106 = vpop.trf.xlu0
    %vm107 = vcmask 130048
    %v109 = vsel %vm107, %v91, 0
    %111 = vmatpush.msra.mxu0 0.0
    %112 = vmatpush.msra.mxu0 0.0
    %113 = vmatpush.msra.mxu0 0.0
    %114 = vmatpush.msra.mxu0 0.0
    %115 = vmatpush.msra.mxu0 0.0
    %116 = vmatpush.msra.mxu0 0.0
    %117 = vmatpush.msra.mxu0 0.0
    %118 = vmatpush.msra.mxu0 0.0
    %119 = vmatpush.msra.mxu0 0.0
    %120 = vmatpush.msra.mxu0 0.0
    %121 = vmatpush.msra.mxu0 0.0
    %122 = vmatpush.msra.mxu0 0.0
    %123 = vmatpush.msra.mxu0 0.0
    %124 = vmatpush.msra.mxu0 0.0
    %125 = vmatpush.msra.mxu0 %v74
    %126 = vmatpush.msra.mxu0 %v71
    %127 = vmatmul.f32.gmra.mxu0 %v109
    %v128 = vpop.f32.mrf.mxu0
    %v129 = vadd.f32 0.0, %v128
    %130 = vdwg.mxu0
    %131 = vmatpush.msra.mxu0 0.0
    %132 = vmatpush.msra.mxu0 0.0
    %133 = vmatpush.msra.mxu0 0.0
    %134 = vmatpush.msra.mxu0 0.0
    %135 = vmatpush.msra.mxu0 0.0
    %136 = vmatpush.msra.mxu0 0.0
    %137 = vmatpush.msra.mxu0 0.0
    %138 = vmatpush.msra.mxu0 0.0
    %139 = vmatpush.msra.mxu0 0.0
    %140 = vmatpush.msra.mxu0 0.0
    %141 = vmatpush.msra.mxu0 0.0
    %142 = vmatpush.msra.mxu0 0.0
    %143 = vmatpush.msra.mxu0 0.0
    %144 = vmatpush.msra.mxu0 0.0
    %145 = vmatpush.msra.mxu0 0.0
    %146 = vmatpush.msra.mxu0 %v38
    %147 = vmatmul.f32.gmra.mxu0 %v41
    %v148 = vpop.f32.mrf.mxu0
    %v149 = vadd.f32 0.0, %v148
    %150 = vmatmul.f32.gmra.mxu0 %v44
    %v151 = vpop.f32.mrf.mxu0
    %v152 = vadd.f32 0.0, %v151
    %153 = vdwg.mxu0
    %v154 = vmul.f32 %v149, %v35
    %v155 = vmul.f32 %v152, %v36
    %v156 = vsub.f32 %v154, %v155
    %v157 = vmul.f32 %v149, %v36
    %v158 = vmul.f32 %v152, %v35
    %v159 = vadd.f32 %v157, %v158
    %160 = vmatpush.msra.mxu0 0.0
    %161 = vmatpush.msra.mxu0 0.0
    %162 = vmatpush.msra.mxu0 0.0
    %163 = vmatpush.msra.mxu0 0.0
    %164 = vmatpush.msra.mxu0 0.0
    %165 = vmatpush.msra.mxu0 0.0
    %166 = vmatpush.msra.mxu0 0.0
    %167 = vmatpush.msra.mxu0 0.0
    %168 = vmatpush.msra.mxu0 0.0
    %169 = vmatpush.msra.mxu0 0.0
    %170 = vmatpush.msra.mxu0 0.0
    %171 = vmatpush.msra.mxu0 0.0
    %172 = vmatpush.msra.mxu0 0.0
    %173 = vmatpush.msra.mxu0 0.0
    %174 = vmatpush.msra.mxu0 %v159
    %175 = vmatpush.msra.mxu0 %v156
    %176 = vmatmul.f32.gmra.mxu0 %v109
    %v177 = vpop.f32.mrf.mxu0
    %v178 = vadd.f32 0.0, %v177
    %179 = vdwg.mxu0
    %v180 = vld [vmem:[%s3] sm:$0x1]
    %v181 = vld [vmem:[%s4] sm:$0x1]
    %v182 = vadd.f32 %v129, %v37
    %v183 = vadd.f32 %v178, %v38
    %vm184 = vcmask 261120
    %v185 = vsel %vm184, %v182, 0.0
    %186 = vadd.xlane.f32.xlu0 %v185
    %v187 = vpop.xlane.xlu0 %186
    %v188 = vsel %vm184, %v183, 0.0
    %189 = vadd.xlane.f32.xlu0 %v188
    %v190 = vpop.xlane.xlu0 %189
    %v191 = vrcp.pop 32.0
    %v192 = vmul.f32 32.0, %v191
    %v193 = vsub.f32 1.0, %v192
    %v194 = vmul.f32 %v191, %v193
    %v195 = vadd.f32 %v191, %v194
    %vm196 = vweird.f32 %v191
    %v197 = vsel %vm196, %v191, %v195
    %v198 = vmul.f32 %v187, %v197
    %v199 = vmul.f32 %v190, %v197
    %v200 = vsub.f32 %v182, %v198
    %v201 = vsub.f32 %v183, %v199
    %v202 = vmul.f32 %v200, %v200
    %v203 = vmul.f32 %v201, %v201
    %v204 = vsel %vm184, %v202, 0.0
    %205 = vadd.xlane.f32.xlu0 %v204
    %v206 = vpop.xlane.xlu0 %205
    %v207 = vsel %vm184, %v203, 0.0
    %208 = vadd.xlane.f32.xlu0 %v207
    %v209 = vpop.xlane.xlu0 %208
    %v210 = vmul.f32 %v206, %v197
    %v211 = vmul.f32 %v209, %v197
    %v212 = vadd.f32 %v210, 1e-12
    %v213 = vadd.f32 %v211, 1e-12
    %v214 = vrsqrt.pop %v212
    %v215 = vmul.f32 %v214, %v212
    %v216 = vmul.f32 %v215, %v214
    %v217 = vmul.f32 0.5, %v216
    %v218 = vsub.f32 1.5, %v217
    %v219 = vmul.f32 %v214, %v218
    %vm220 = vweird.f32 %v212
    %vm221 = vweird.f32 %v214
    %vm222 = vmor %vm220, %vm221
    %v223 = vsel %vm222, %v214, %v219
    %v224 = vrsqrt.pop %v213
    %v225 = vmul.f32 %v224, %v213
    %v226 = vmul.f32 %v225, %v224
    %v227 = vmul.f32 0.5, %v226
    %v228 = vsub.f32 1.5, %v227
    %v229 = vmul.f32 %v224, %v228
    %vm230 = vweird.f32 %v213
    %vm231 = vweird.f32 %v224
    %vm232 = vmor %vm230, %vm231
    %v233 = vsel %vm232, %v224, %v229
    %v234 = vmul.f32 %v200, %v223
    %v235 = vmul.f32 %v201, %v233
    %v237 = vperm.slane %v180, 0
    %v239 = vmul.f32 %v234, %v237
    %v240 = vmul.f32 %v235, %v237
    %v242 = vperm.slane %v181, 0
    %v244 = vadd.f32 %v239, %v242
    %v245 = vadd.f32 %v240, %v242
    %v246 = vld [vmem:[%s5] sm:$0xff]
    %v247 = vld [vmem:[%s5 + $0x8] sm:$0xff]
    %v248 = vld [vmem:[%s5 + $0x10] sm:$0xff]
    %v249 = vld [vmem:[%s5 + $0x18] sm:$0xff]
    %v250 = vld [vmem:[%s6] sm:$0x1]
    %v252 = vperm.slane %v250, 0
    %v255 = vsel %vm184, %v244, 0
    %v258 = vsel %vm184, %v245, 0
    %260 = vmatpush.msra.mxu0 0.0
    %261 = vmatpush.msra.mxu0 0.0
    %262 = vmatpush.msra.mxu0 0.0
    %263 = vmatpush.msra.mxu0 0.0
    %264 = vmatpush.msra.mxu0 0.0
    %265 = vmatpush.msra.mxu0 0.0
    %266 = vmatpush.msra.mxu0 0.0
    %267 = vmatpush.msra.mxu0 0.0
    %268 = vmatpush.msra.mxu0 0.0
    %269 = vmatpush.msra.mxu0 0.0
    %270 = vmatpush.msra.mxu0 0.0
    %271 = vmatpush.msra.mxu0 0.0
    %272 = vmatpush.msra.mxu0 %v249
    %273 = vmatpush.msra.mxu0 %v248
    %274 = vmatpush.msra.mxu0 %v247
    %275 = vmatpush.msra.mxu0 %v246
    %276 = vmatmul.f32.gmra.mxu0 %v255
    %v277 = vpop.f32.mrf.mxu0
    %v278 = vadd.f32 %v252, %v277
    %279 = vmatmul.f32.gmra.mxu0 %v258
    %v280 = vpop.f32.mrf.mxu0
    %v281 = vadd.f32 %v252, %v280
    %282 = vdwg.mxu0
    %v283 = vmul.f32 %v278, 0.5
    %v284 = vmul.f32 %v281, 0.5
    %v285 = vmul.f32 %v278, 0.70710677
    %v286 = vmul.f32 %v281, 0.70710677
    %v287 = vmul.f32 %v285, %v285
    %v288 = vmin.f32 16.0, %v287
    %v289 = vmul.f32 %v288, 2.1237322e-06
    %v290 = vadd.f32 %v289, 0.00028619796
    %v291 = vmul.f32 %v288, %v290
    %v292 = vadd.f32 %v291, 0.0036580483
    %v293 = vmul.f32 %v288, %v292
    %v294 = vadd.f32 %v293, 0.05243302
    %v295 = vmul.f32 %v288, %v294
    %v296 = vadd.f32 %v295, 0.18741608
    %v297 = vmul.f32 %v288, %v296
    %v298 = vadd.f32 %v297, 1.1283791
    %v299 = vmul.f32 %v285, %v298
    %v300 = vmul.f32 %v288, 3.8918573e-05
    %v301 = vadd.f32 %v300, 0.001143296
    %v302 = vmul.f32 %v288, %v301
    %v303 = vadd.f32 %v302, 0.014752088
    %v304 = vmul.f32 %v288, %v303
    %v305 = vadd.f32 %v304, 0.112945676
    %v306 = vmul.f32 %v288, %v305
    %v307 = vadd.f32 %v306, 0.4994258
    %v308 = vmul.f32 %v288, %v307
    %v309 = vadd.f32 %v308, 1.0
    %v310 = vrcp.pop %v309
    %v311 = vmul.f32 %v309, %v310
    %v312 = vsub.f32 1.0, %v311
    %v313 = vmul.f32 %v310, %v312
    %v314 = vadd.f32 %v310, %v313
    %vm315 = vweird.f32 %v309
    %vm316 = vweird.f32 %v310
    %vm317 = vmor %vm315, %vm316
    %v318 = vsel %vm317, %v310, %v314
    %v319 = vand.u32 2147483647, %v309
    %vm320 = vcmp.eq.f32.partialorder %v319, 8.507059e+37
    %v321 = vand.u32 %v309, 2147483648
    %v322 = vor.u32 1.1754944e-38, %v321
    %v323 = vsel %vm320, %v322, %v318
    %v324 = vmul.f32 %v299, %v323
    %v325 = vmin.f32 %v324, 1.0
    %v326 = vmax.f32 %v325, -1.0
    %v327 = vmul.f32 %v286, %v286
    %v328 = vmin.f32 16.0, %v327
    %v329 = vmul.f32 %v328, 2.1237322e-06
    %v330 = vadd.f32 %v329, 0.00028619796
    %v331 = vmul.f32 %v328, %v330
    %v332 = vadd.f32 %v331, 0.0036580483
    %v333 = vmul.f32 %v328, %v332
    %v334 = vadd.f32 %v333, 0.05243302
    %v335 = vmul.f32 %v328, %v334
    %v336 = vadd.f32 %v335, 0.18741608
    %v337 = vmul.f32 %v328, %v336
    %v338 = vadd.f32 %v337, 1.1283791
    %v339 = vmul.f32 %v286, %v338
    %v340 = vmul.f32 %v328, 3.8918573e-05
    %v341 = vadd.f32 %v340, 0.001143296
    %v342 = vmul.f32 %v328, %v341
    %v343 = vadd.f32 %v342, 0.014752088
    %v344 = vmul.f32 %v328, %v343
    %v345 = vadd.f32 %v344, 0.112945676
    %v346 = vmul.f32 %v328, %v345
    %v347 = vadd.f32 %v346, 0.4994258
    %v348 = vmul.f32 %v328, %v347
    %v349 = vadd.f32 %v348, 1.0
    %v350 = vrcp.pop %v349
    %v351 = vmul.f32 %v349, %v350
    %v352 = vsub.f32 1.0, %v351
    %v353 = vmul.f32 %v350, %v352
    %v354 = vadd.f32 %v350, %v353
    %vm355 = vweird.f32 %v349
    %vm356 = vweird.f32 %v350
    %vm357 = vmor %vm355, %vm356
    %v358 = vsel %vm357, %v350, %v354
    %v359 = vand.u32 2147483647, %v349
    %vm360 = vcmp.eq.f32.partialorder %v359, 8.507059e+37
    %v361 = vand.u32 %v349, 2147483648
    %v362 = vor.u32 1.1754944e-38, %v361
    %v363 = vsel %vm360, %v362, %v358
    %v364 = vmul.f32 %v339, %v363
    %v365 = vmin.f32 %v364, 1.0
    %v366 = vmax.f32 %v365, -1.0
    %v367 = vadd.f32 %v326, 1.0
    %v368 = vadd.f32 %v366, 1.0
    %v369 = vmul.f32 %v283, %v367
    %v370 = vmul.f32 %v284, %v368
    %v371 = vld [vmem:[%s7] sm:$0xff]
    %v372 = vld [vmem:[%s7 + $0x8] sm:$0xff]
    %v373 = vld [vmem:[%s7 + $0x10] sm:$0xff]
    %v374 = vld [vmem:[%s7 + $0x18] sm:$0xff]
    %v375 = vld [vmem:[%s7 + $0x20] sm:$0xff]
    %v376 = vld [vmem:[%s7 + $0x28] sm:$0xff]
    %v377 = vld [vmem:[%s7 + $0x30] sm:$0xff]
    %v378 = vld [vmem:[%s7 + $0x38] sm:$0xff]
    %v379 = vld [vmem:[%s7 + $0x40] sm:$0xff]
    %v380 = vld [vmem:[%s7 + $0x48] sm:$0xff]
    %v381 = vld [vmem:[%s7 + $0x50] sm:$0xff]
    %v382 = vld [vmem:[%s7 + $0x58] sm:$0xff]
    %v383 = vld [vmem:[%s7 + $0x60] sm:$0xff]
    %v384 = vld [vmem:[%s7 + $0x68] sm:$0xff]
    %v385 = vld [vmem:[%s7 + $0x70] sm:$0xff]
    %v386 = vld [vmem:[%s7 + $0x78] sm:$0xff]
    %v387 = vld [vmem:[%s8] sm:$0x1]
    %v389 = vperm.slane %v387, 0
    %391 = vmatpush.msra.mxu0 %v386
    %392 = vmatpush.msra.mxu0 %v385
    %393 = vmatpush.msra.mxu0 %v384
    %394 = vmatpush.msra.mxu0 %v383
    %395 = vmatpush.msra.mxu0 %v382
    %396 = vmatpush.msra.mxu0 %v381
    %397 = vmatpush.msra.mxu0 %v380
    %398 = vmatpush.msra.mxu0 %v379
    %399 = vmatpush.msra.mxu0 %v378
    %400 = vmatpush.msra.mxu0 %v377
    %401 = vmatpush.msra.mxu0 %v376
    %402 = vmatpush.msra.mxu0 %v375
    %403 = vmatpush.msra.mxu0 %v374
    %404 = vmatpush.msra.mxu0 %v373
    %405 = vmatpush.msra.mxu0 %v372
    %406 = vmatpush.msra.mxu0 %v371
    %407 = vmatmul.f32.gmra.mxu0 %v369
    %v408 = vpop.f32.mrf.mxu0
    %v409 = vadd.f32 %v389, %v408
    %410 = vmatmul.f32.gmra.mxu0 %v370
    %v411 = vpop.f32.mrf.mxu0
    %v412 = vadd.f32 %v389, %v411
    %413 = vdwg.mxu0
    %v414 = vadd.f32 %v409, %v37
    %v415 = vadd.f32 %v412, %v38
    %v416 = vsel %vm184, %v414, 0.0
    %417 = vadd.xlane.f32.xlu0 %v416
    %v418 = vpop.xlane.xlu0 %417
    %v419 = vsel %vm184, %v415, 0.0
    %420 = vadd.xlane.f32.xlu0 %v419
    %v421 = vpop.xlane.xlu0 %420
    %v422 = vmul.f32 %v418, %v197
    %v423 = vmul.f32 %v421, %v197
    %v424 = vsub.f32 %v414, %v422
    %v425 = vsub.f32 %v415, %v423
    %v426 = vmul.f32 %v424, %v424
    %v427 = vmul.f32 %v425, %v425
    %v428 = vsel %vm184, %v426, 0.0
    %429 = vadd.xlane.f32.xlu0 %v428
    %v430 = vpop.xlane.xlu0 %429
    %v431 = vsel %vm184, %v427, 0.0
    %432 = vadd.xlane.f32.xlu0 %v431
    %v433 = vpop.xlane.xlu0 %432
    %v434 = vmul.f32 %v430, %v197
    %v435 = vmul.f32 %v433, %v197
    %v436 = vadd.f32 %v434, 1e-12
    %v437 = vadd.f32 %v435, 1e-12
    %v438 = vrsqrt.pop %v436
    %v439 = vmul.f32 %v438, %v436
    %v440 = vmul.f32 %v439, %v438
    %v441 = vmul.f32 0.5, %v440
    %v442 = vsub.f32 1.5, %v441
    %v443 = vmul.f32 %v438, %v442
    %vm444 = vweird.f32 %v436
    %vm445 = vweird.f32 %v438
    %vm446 = vmor %vm444, %vm445
    %v447 = vsel %vm446, %v438, %v443
    %v448 = vrsqrt.pop %v437
    %v449 = vmul.f32 %v448, %v437
    %v450 = vmul.f32 %v449, %v448
    %v451 = vmul.f32 0.5, %v450
    %v452 = vsub.f32 1.5, %v451
    %v453 = vmul.f32 %v448, %v452
    %vm454 = vweird.f32 %v437
    %vm455 = vweird.f32 %v448
    %vm456 = vmor %vm454, %vm455
    %v457 = vsel %vm456, %v448, %v453
    %v458 = vmul.f32 %v424, %v447
    %v459 = vmul.f32 %v425, %v457
    %v460 = vmul.f32 %v458, %v237
    %v461 = vmul.f32 %v459, %v237
    %v462 = vadd.f32 %v460, %v242
    %v463 = vadd.f32 %v461, %v242
    %464 = vst.msk [vmem:[#allocation2] sm:$0xff] %vm184, %v462
    %465 = vst.msk [vmem:[#allocation2 + $0x8] sm:$0xff] %vm184, %v463
    // Predicated region
    $region38: #{fmlp_forward.1} parent=1 // pred_check
      _
    $region39: #{fmlp_forward.1} parent=1 // pred_check_branch
      %467 = sbr.rel (0) target = $region41
    $region40: #{fmlp_forward.1} parent=1 // pred_region
      %469 = vsyncadd [#allocation3], 0
      %s470 = sshll.u32 [#allocation2], 4
      %s471 = int_to_ptr.vmem [resolvable:$true] %s470
      %s472 = sshll.u32 %s9, 4
      %s473 = int_to_ptr.hbm [resolvable:$true] %s472
      %478 = dma.vmem_to_hbm [thread:$0]  %s471, 256, %s473, [#allocation3], 128, 128, 8
    $region41: #{fmlp_forward.1} parent=1 // pred_fallthru
      _
    // Predicated region
    $region42: #{fmlp_forward.1} parent=1 // pred_check
      _
    $region43: #{fmlp_forward.1} parent=1 // pred_check_branch
      %480 = sbr.rel (0) target = $region45
    $region44: #{fmlp_forward.1} parent=1 // pred_region
      %482 = dma.done [#allocation3], 256
    $region45: #{fmlp_forward.1} parent=1 // pred_fallthru
      _
    %483 = vsyncpa [#allocation3], 1

</llo_original>
